<compile_context>
chip_gen: v7x
topology: tpu7x:2x2x1
jax: 0.10.0
libtpu: 0.0.40
codegen_flags: <defaults>
</compile_context>

<pallas_src>
import jax
import jax.numpy as jnp
from jax import lax
from jax.experimental import pallas as pl
from jax.experimental.pallas import tpu as pltpu


def attn_sentiment_kernel(x_ref, wqk_ref, bqk_ref, wv_ref, bv_ref, bcomb_ref,
                          out_ref):
    """Single-sequence single-head attention with fully folded projections.

    x_ref:     (L, E)  bf16  embeddings of the one consumed batch element
    wqk_ref:   (E, E)  bf16  (Wq^T @ Wk) / sqrt(E)
    bqk_ref:   (1, E)  f32   (bq  @ Wk) / sqrt(E)
    wv_ref:    (E, O)  bf16  Wv^T @ Wo^T @ Wfc^T
    bv_ref:    (1, O)  f32   bv   @ Wo^T @ Wfc^T
    bcomb_ref: (1, O)  f32   bo @ Wfc^T + bfc
    out_ref:   (L, O)  f32   sigmoid(logits)
    """
    x = x_ref[...]                                                     # (L, E) bf16

    # Folded Q/K: scores[i, j] = (x_i @ Wqk + bqk) . x_j.
    # (Query-only bias terms are constant along the softmax axis -> dropped.)
    qk = (jnp.dot(x, wqk_ref[...], preferred_element_type=jnp.float32)
          + bqk_ref[...]).astype(jnp.bfloat16)                         # (L, E)
    scores = lax.dot_general(qk, x, (((1,), (1,)), ((), ())),
                             preferred_element_type=jnp.float32)       # (L, L)

    # Softmax over the key axis.
    m = jnp.max(scores, axis=-1, keepdims=True)
    e = jnp.exp(scores - m)
    denom = jnp.sum(e, axis=-1, keepdims=True)
    attn = e * pl.reciprocal(denom, approx=True)                       # (L, L) f32

    # Folded V / MHA out-proj / FC head.
    v_proj = (jnp.dot(x, wv_ref[...], preferred_element_type=jnp.float32)
              + bv_ref[...])                                           # (L, O) f32
    logits = (jnp.dot(attn, v_proj, preferred_element_type=jnp.float32)
              + bcomb_ref[...])                                        # (L, O)
    out_ref[...] = jax.nn.sigmoid(logits)


def attention_sentiment_forward(x_lne, params):
    """x_lne: (L, N, E) float32 embeddings. Returns (L,) like the PyTorch module."""
    L, N, E = x_lne.shape
    O = params["wfc_t"].shape[1]

    # x.view(L, -1)[:, -1] consumes only (batch N-1, output column O-1), and
    # single-head self-attention (no mask, no dropout) is batch-independent:
    # compute only that one sequence.
    # TODO(synk): revisit this slicing if the module ever gains key_padding_mask,
    # dropout, or multiple heads.
    x_last = x_lne[:, N - 1, :].astype(jnp.bfloat16)                   # (L, E)

    inv_sqrt_e = 1.0 / jnp.sqrt(jnp.float32(E))
    # Q/K fold (prep in f32, then cast the big weight to bf16).
    wqk = (params["wq_t"] @ params["wk_t"].T) * inv_sqrt_e             # (E, E)
    bqk = (params["bq"] @ params["wk_t"].T) * inv_sqrt_e               # (1, E)
    # V / out-proj / FC fold.
    w_comb = params["wo_t"] @ params["wfc_t"]                          # (E, O)
    b_comb = params["bo"] @ params["wfc_t"] + params["bfc"]            # (1, O)
    wv_fused = params["wv_t"] @ w_comb                                 # (E, O)
    bv_fused = params["bv"] @ w_comb                                   # (1, O)

    vmem = lambda: pl.BlockSpec(memory_space=pltpu.MemorySpace.VMEM)

    out = pl.pallas_call(
        attn_sentiment_kernel,
        out_shape=jax.ShapeDtypeStruct((L, O), jnp.float32),
        in_specs=[vmem() for _ in range(6)],       # whole (tiny) arrays in VMEM
        out_specs=vmem(),
    )(x_last,
      wqk.astype(jnp.bfloat16), bqk,
      wv_fused.astype(jnp.bfloat16), bv_fused, b_comb)

    return out[:, O - 1]                                               # (L,)


def reference_forward(x_lne, params):
    """Pure-JAX f32 reference of the ORIGINAL full-batch math (correctness gate)."""
    q = x_lne @ params["wq_t"] + params["bq"]
    k = x_lne @ params["wk_t"] + params["bk"]
    v = x_lne @ params["wv_t"] + params["bv"]
    scale = 1.0 / jnp.sqrt(jnp.float32(q.shape[-1]))
    scores = jnp.einsum("lne,mne->nlm", q, k) * scale
    attn = jax.nn.softmax(scores, axis=-1)
    ctx = jnp.einsum("nlm,mne->lne", attn, v)
    proj = ctx @ params["wo_t"] + params["bo"]
    y = jax.nn.sigmoid(proj @ params["wfc_t"] + params["bfc"])
    L = x_lne.shape[0]
    return y.reshape(L, -1)[:, -1]


if __name__ == "__main__":
    # Small shapes consistent with the module (orig L=25, N=600, E=300, O=1).
    L, N, E, O = 8, 4, 32, 1
    vocab_size = 50

    key = jax.random.PRNGKey(0)
    ks = jax.random.split(key, 12)

    # Deterministic "embedding dictionary" (row 0 zeroed, as in open_embed_dict).
    emb_table = jax.random.normal(ks[0], (vocab_size, E), jnp.float32) * 0.1
    emb_table = emb_table.at[0].set(0.0)

    input_words = jax.random.randint(ks[1], (L, N), 0, vocab_size)
    x = emb_table[input_words]   # (L, N, E) -- embedding lookup = plain-JAX glue

    def lin_init(k, shape, fan_in):
        bound = 1.0 / jnp.sqrt(jnp.float32(fan_in))
        return jax.random.uniform(k, shape, jnp.float32, -bound, bound)

    # MultiheadAttention(E, num_heads=1) parameters (pre-transposed for the kernel).
    params = {
        "wq_t": lin_init(ks[2], (E, E), E).T,
        "wk_t": lin_init(ks[3], (E, E), E).T,
        "wv_t": lin_init(ks[4], (E, E), E).T,
        "bq": lin_init(ks[5], (1, E), E),
        "bk": lin_init(ks[6], (1, E), E),
        "bv": lin_init(ks[7], (1, E), E),
        "wo_t": lin_init(ks[8], (E, E), E).T,
        "bo": lin_init(ks[9], (1, E), E),
        # fc: Linear(E, O)
        "wfc_t": lin_init(ks[10], (O, E), E).T,
        "bfc": lin_init(ks[11], (1, O), E),
    }

    out = attention_sentiment_forward(x, params)
    out = jax.block_until_ready(out)

    ref = reference_forward(x, params)
    assert out.shape == (L,), out.shape
    # Tolerance accounts for bf16-cast weights/activations (folded W's), the
    # algebraic refolds, and the EUP approx reciprocal in the softmax; the
    # reference is the exact f32 full-batch computation.
    assert jnp.allclose(out, ref, atol=1e-2, rtol=1e-2), (out, ref)

    print("KERNEL_OK")
</pallas_src>

<mosaic_0001>
module attributes {stable_mosaic.version = 11 : i64} {
  func.func @attn_sentiment_kernel(%arg0: memref<8x32xbf16, #tpu.memory_space<vmem>>, %arg1: memref<32x32xbf16, #tpu.memory_space<vmem>>, %arg2: memref<1x32xf32, #tpu.memory_space<vmem>>, %arg3: memref<32x1xbf16, #tpu.memory_space<vmem>>, %arg4: memref<1x1xf32, #tpu.memory_space<vmem>>, %arg5: memref<1x1xf32, #tpu.memory_space<vmem>>, %arg6: memref<8x1xf32, #tpu.memory_space<vmem>>) attributes {dimension_semantics = [], scalar_prefetch = 0 : i64, scratch_operands = 0 : i64, tpu.core_type = #tpu.core_type<tc>} {
    %c0 = arith.constant 0 : index
    %c0_0 = arith.constant 0 : index
    %0 = vector.load %arg0[%c0, %c0_0] : memref<8x32xbf16, #tpu.memory_space<vmem>>, vector<8x32xbf16>
    %c0_1 = arith.constant 0 : index
    %c0_2 = arith.constant 0 : index
    %1 = vector.load %arg1[%c0_1, %c0_2] : memref<32x32xbf16, #tpu.memory_space<vmem>>, vector<32x32xbf16>
    %cst = arith.constant dense<0.000000e+00> : vector<8x32xf32>
    %2 = tpu.matmul %0, %1, %cst {dimension_numbers = #tpu.dot_dimension_numbers<[1], [0], [0], [1], [0, 0, 1, 1], [], []>} : vector<8x32xbf16>, vector<32x32xbf16>, vector<8x32xf32> -> vector<8x32xf32>
    %c0_3 = arith.constant 0 : index
    %c0_4 = arith.constant 0 : index
    %3 = vector.load %arg2[%c0_3, %c0_4] : memref<1x32xf32, #tpu.memory_space<vmem>>, vector<1x32xf32>
    %4 = vector.broadcast %3 : vector<1x32xf32> to vector<8x32xf32>
    %5 = arith.addf %2, %4 : vector<8x32xf32>
    %6 = arith.truncf %5 : vector<8x32xf32> to vector<8x32xbf16>
    %cst_5 = arith.constant dense<0.000000e+00> : vector<8x8xf32>
    %7 = tpu.matmul %6, %0, %cst_5 {dimension_numbers = #tpu.dot_dimension_numbers<[1], [1], [0], [0], [0, 0, 1, 0], [], []>} : vector<8x32xbf16>, vector<8x32xbf16>, vector<8x8xf32> -> vector<8x8xf32>
    %cst_6 = arith.constant dense<0xFF800000> : vector<8xf32>
    %8 = vector.multi_reduction <maximumf>, %7, %cst_6 [1] : vector<8x8xf32> to vector<8xf32>
    %9 = vector.shape_cast %8 : vector<8xf32> to vector<8x1xf32>
    %10 = vector.broadcast %9 : vector<8x1xf32> to vector<8x8xf32>
    %11 = arith.subf %7, %10 : vector<8x8xf32>
    %12 = math.exp %11 : vector<8x8xf32>
    %cst_7 = arith.constant dense<0.000000e+00> : vector<8xf32>
    %13 = vector.multi_reduction <add>, %12, %cst_7 [1] : vector<8x8xf32> to vector<8xf32>
    %14 = vector.shape_cast %13 : vector<8xf32> to vector<8x1xf32>
    %15 = tpu.reciprocal %14 {approx = true} : vector<8x1xf32> -> vector<8x1xf32>
    %16 = vector.broadcast %15 : vector<8x1xf32> to vector<8x8xf32>
    %17 = arith.mulf %12, %16 : vector<8x8xf32>
    %c0_8 = arith.constant 0 : index
    %c0_9 = arith.constant 0 : index
    %18 = vector.load %arg3[%c0_8, %c0_9] : memref<32x1xbf16, #tpu.memory_space<vmem>>, vector<32x1xbf16>
    %cst_10 = arith.constant dense<0.000000e+00> : vector<8x1xf32>
    %19 = tpu.matmul %0, %18, %cst_10 {dimension_numbers = #tpu.dot_dimension_numbers<[1], [0], [0], [1], [0, 0, 1, 1], [], []>} : vector<8x32xbf16>, vector<32x1xbf16>, vector<8x1xf32> -> vector<8x1xf32>
    %c0_11 = arith.constant 0 : index
    %c0_12 = arith.constant 0 : index
    %20 = vector.load %arg4[%c0_11, %c0_12] : memref<1x1xf32, #tpu.memory_space<vmem>>, vector<1x1xf32>
    %21 = vector.broadcast %20 : vector<1x1xf32> to vector<8x1xf32>
    %22 = arith.addf %19, %21 : vector<8x1xf32>
    %cst_13 = arith.constant dense<0.000000e+00> : vector<8x1xf32>
    %23 = tpu.matmul %17, %22, %cst_13 {dimension_numbers = #tpu.dot_dimension_numbers<[1], [0], [0], [1], [0, 0, 1, 1], [], []>} : vector<8x8xf32>, vector<8x1xf32>, vector<8x1xf32> -> vector<8x1xf32>
    %c0_14 = arith.constant 0 : index
    %c0_15 = arith.constant 0 : index
    %24 = vector.load %arg5[%c0_14, %c0_15] : memref<1x1xf32, #tpu.memory_space<vmem>>, vector<1x1xf32>
    %25 = vector.broadcast %24 : vector<1x1xf32> to vector<8x1xf32>
    %26 = arith.addf %23, %25 : vector<8x1xf32>
    %27 = arith.negf %26 : vector<8x1xf32>
    %28 = math.exp %27 : vector<8x1xf32>
    %cst_16 = arith.constant 1.000000e+00 : f32
    %29 = vector.broadcast %cst_16 : f32 to vector<8x1xf32>
    %30 = arith.addf %29, %28 : vector<8x1xf32>
    %31 = arith.divf %29, %30 : vector<8x1xf32>
    %c0_17 = arith.constant 0 : index
    %c0_18 = arith.constant 0 : index
    %32 = vector.load %arg6[%c0_17, %c0_18] : memref<8x1xf32, #tpu.memory_space<vmem>>, vector<8x1xf32>
    tpu.vector_store %arg6[%c0_17, %c0_18], %31 {strides = array<i32>} : memref<8x1xf32, #tpu.memory_space<vmem>>, vector<8x1xf32>,
    return
  }
}

</mosaic_0001>

<llo_original>
// kernel: tpu_custom_call.1
$region0: #{tpu_custom_call.1}
  #allocation0 [shape = 'u32[]', space=smem, size = 0x4, offset = 0x4, fixed_abs, tag = 'smem constant byte address 0x4 - core index']
  #allocation1 [shape = 'u32[144,128]{1,0:T(1,128)}', space=vmem, size = 0x12000, scoped, tag = 'internal scratch']
  #allocation2 [shape = 'f32[1,1]{1,0:T(1,128)S(1)}', space=vmem, size = 0x200, scoped, tag = 'scoped memory for tpu_custom_call.1']
  #allocation3 [shape = 'f32[1,1]{1,0:T(1,128)S(1)}', space=vmem, size = 0x200, scoped, tag = 'scoped memory for tpu_custom_call.1']
  %s0 = inlined_call_operand.vmem [shape: bf16[8,32], index: 0, kind: input, shape index: {}]
  %s1 = inlined_call_operand.vmem [shape: bf16[32,32], index: 1, kind: input, shape index: {}]
  %s2 = inlined_call_operand.vmem [shape: f32[1,32], index: 2, kind: input, shape index: {}]
  %s3 = inlined_call_operand.vmem [shape: bf16[32,1], index: 3, kind: input, shape index: {}]
  %s4 = inlined_call_operand.<no memory space> [shape: f32[1,1], index: 4, kind: input, shape index: {}]
  %s5 = inlined_call_operand.<no memory space> [shape: f32[1,1], index: 5, kind: input, shape index: {}]
  %s6 = inlined_call_operand.vmem [shape: f32[8,1], index: 6, kind: output, shape index: {}]
  %s7 = sld [smem:[#allocation0]]
  $region34: #{tpu_custom_call.1} parent=0
    _
  %s9 = ssub.s32 1, %s7
  %s10 = scalar_select 0, %s9, %s7
  %v11 = vstv %s4
  %12 = vst [vmem:[#allocation2] sm:$0x1] %v11
  %v13 = vstv %s5
  %14 = vst [vmem:[#allocation3] sm:$0x1] %v13
  // Predicated region
  $region2: #{tpu_custom_call.1} parent=0 // pred_check
    _
  $region3: #{tpu_custom_call.1} parent=0 // pred_check_branch
    %16 = sbr.rel (0) target = $region5
  $region4: #{tpu_custom_call.1} parent=0 // pred_region
    _
  $region5: #{tpu_custom_call.1} parent=0 // pred_fallthru
    _
  // Predicated region
  $region6: #{tpu_custom_call.1} parent=0 // pred_check
    _
  $region7: #{tpu_custom_call.1} parent=0 // pred_check_branch
    %18 = sbr.rel (0) target = $region9
  $region8: #{tpu_custom_call.1} parent=0 // pred_region
    _
  $region9: #{tpu_custom_call.1} parent=0 // pred_fallthru
    _
  // Predicated region
  $region10: #{tpu_custom_call.1} parent=0 // pred_check
    _
  $region11: #{tpu_custom_call.1} parent=0 // pred_check_branch
    %20 = sbr.rel (0) target = $region13
  $region12: #{tpu_custom_call.1} parent=0 // pred_region
    _
  $region13: #{tpu_custom_call.1} parent=0 // pred_fallthru
    _
  // Predicated region
  $region14: #{tpu_custom_call.1} parent=0 // pred_check
    _
  $region15: #{tpu_custom_call.1} parent=0 // pred_check_branch
    %22 = sbr.rel (0) target = $region17
  $region16: #{tpu_custom_call.1} parent=0 // pred_region
    _
  $region17: #{tpu_custom_call.1} parent=0 // pred_fallthru
    _
  // Predicated region
  $region18: #{tpu_custom_call.1} parent=0 // pred_check
    _
  $region19: #{tpu_custom_call.1} parent=0 // pred_check_branch
    %24 = sbr.rel (0) target = $region21
  $region20: #{tpu_custom_call.1} parent=0 // pred_region
    _
  $region21: #{tpu_custom_call.1} parent=0 // pred_fallthru
    _
  // Predicated region
  $region22: #{tpu_custom_call.1} parent=0 // pred_check
    _
  $region23: #{tpu_custom_call.1} parent=0 // pred_check_branch
    %26 = sbr.rel (0) target = $region25
  $region24: #{tpu_custom_call.1} parent=0 // pred_region
    _
  $region25: #{tpu_custom_call.1} parent=0 // pred_fallthru
    _
  %v28 = vld [vmem:[%s0] sm:$0xf]
  %v29 = vld [vmem:[%s1] sm:$0xf]
  %v30 = vld [vmem:[%s1 + $0x4] sm:$0xf]
  %v31 = vld [vmem:[%s1 + $0x8] sm:$0xf]
  %v32 = vld [vmem:[%s1 + $0xc] sm:$0xf]
  %v33 = vld [vmem:[%s2] sm:$0x1]
  %v35 = vlaneseq
  %v36 = vshrl.u32 %v35, 7
  %v37 = vsub.s32 0, %v36
  %v38 = vrot.slane %v33, %v37
  %v44 = vunpack.c.l.b16 %v29
  %v45 = vunpack.c.l.b16 %v30
  %v46 = vunpack.c.l.b16 %v31
  %v47 = vunpack.c.l.b16 %v32
  %v48 = vpack.c.b16 %v45, %v44
  %v49 = vpack.c.b16 %v47, %v46
  %vm52 = vcmask 261120
  %v54 = vsel %vm52, %v28, 0
  %56 = vmatprep.subr.bf16.mxu0 0
  %57 = vmatpush1.bf16.msra.mxu0 %v48
  %58 = vmatprep.subr.bf16.mxu0 0
  %59 = vmatpush1.bf16.msra.mxu0 %v49
  %60 = vmatprep.subr.bf16.mxu0 0
  %61 = vmatpush1.bf16.msra.mxu0 0
  %62 = vmatprep.subr.bf16.mxu0 0
  %63 = vmatpush1.bf16.msra.mxu0 0
  %64 = vmatprep.subr.bf16.mxu0 0
  %65 = vmatpush1.bf16.msra.mxu0 0
  %66 = vmatprep.subr.bf16.mxu0 0
  %67 = vmatpush1.bf16.msra.mxu0 0
  %68 = vmatprep.subr.bf16.mxu0 0
  %69 = vmatpush1.bf16.msra.mxu0 0
  %70 = vmatprep.subr.bf16.mxu0 0
  %71 = vmatpush1.bf16.msra.mxu0 0
  %72 = vmatprep.subr.bf16.mxu0 0
  %73 = vmatpush1.bf16.msra.mxu0 0
  %74 = vmatprep.subr.bf16.mxu0 0
  %75 = vmatpush1.bf16.msra.mxu0 0
  %76 = vmatprep.subr.bf16.mxu0 0
  %77 = vmatpush1.bf16.msra.mxu0 0
  %78 = vmatprep.subr.bf16.mxu0 0
  %79 = vmatpush1.bf16.msra.mxu0 0
  %80 = vmatprep.subr.bf16.mxu0 0
  %81 = vmatpush1.bf16.msra.mxu0 0
  %82 = vmatprep.subr.bf16.mxu0 0
  %83 = vmatpush1.bf16.msra.mxu0 0
  %84 = vmatprep.subr.bf16.mxu0 0
  %85 = vmatpush1.bf16.msra.mxu0 0
  %86 = vmatprep.subr.bf16.mxu0 0
  %87 = vmatpush1.bf16.msra.mxu0 0
  %88 = vmatprep.mubr.bf16.mxu0 0
  %89 = vmatmul.mubr.bf16.gmra.mrb[0].mxu0 %v54
  %v90 = vpop.f32.mrb[0].mxu0
  %v91 = vadd.f32 %v38, %v90
  %v92 = vpop.f32.mrb[0].mxu0
  %v93 = vpop.f32.mrb[0].mxu0
  %v94 = vpop.f32.mrb[0].mxu0
  %95 = vdwg.mxu0
  %v96 = vpack.c.bf16 %v91, %v91
  %v98 = vsel %vm52, %v96, 0
  %100 = vmatprep.subr.bf16.mxu0 0
  %101 = vmatpush1.bf16.xpose.msra.mxu0 %v54
  %102 = vmatprep.subr.bf16.mxu0 0
  %103 = vmatpush1.bf16.xpose.msra.mxu0 0
  %104 = vmatprep.subr.bf16.mxu0 0
  %105 = vmatpush1.bf16.xpose.msra.mxu0 0
  %106 = vmatprep.subr.bf16.mxu0 0
  %107 = vmatpush1.bf16.xpose.msra.mxu0 0
  %108 = vmatprep.subr.bf16.mxu0 0
  %109 = vmatpush1.bf16.xpose.msra.mxu0 0
  %110 = vmatprep.subr.bf16.mxu0 0
  %111 = vmatpush1.bf16.xpose.msra.mxu0 0
  %112 = vmatprep.subr.bf16.mxu0 0
  %113 = vmatpush1.bf16.xpose.msra.mxu0 0
  %114 = vmatprep.subr.bf16.mxu0 0
  %115 = vmatpush1.bf16.xpose.msra.mxu0 0
  %116 = vmatprep.subr.bf16.mxu0 0
  %117 = vmatpush1.bf16.xpose.msra.mxu0 0
  %118 = vmatprep.subr.bf16.mxu0 0
  %119 = vmatpush1.bf16.xpose.msra.mxu0 0
  %120 = vmatprep.subr.bf16.mxu0 0
  %121 = vmatpush1.bf16.xpose.msra.mxu0 0
  %122 = vmatprep.subr.bf16.mxu0 0
  %123 = vmatpush1.bf16.xpose.msra.mxu0 0
  %124 = vmatprep.subr.bf16.mxu0 0
  %125 = vmatpush1.bf16.xpose.msra.mxu0 0
  %126 = vmatprep.subr.bf16.mxu0 0
  %127 = vmatpush1.bf16.xpose.msra.mxu0 0
  %128 = vmatprep.subr.bf16.mxu0 0
  %129 = vmatpush1.bf16.xpose.msra.mxu0 0
  %130 = vmatprep.subr.bf16.mxu0 0
  %131 = vmatpush1.bf16.xpose.msra.mxu0 0
  %132 = vmatprep.mubr.bf16.mxu0 0
  %133 = vmatmul.mubr.bf16.gmra.mrb[0].mxu0 %v98
  %v134 = vpop.f32.mrb[0].mxu0
  %v135 = vadd.f32 0.0, %v134
  %v136 = vpop.f32.mrb[0].mxu0
  %v137 = vpop.f32.mrb[0].mxu0
  %v138 = vpop.f32.mrb[0].mxu0
  %139 = vdwg.mxu0
  %vm140 = vcmask 64512
  %v141 = vsel %vm140, %v135, -inf
  %142 = vmax.xlane.f32.xlu0 %v141
  %v143 = vpop.xlane.xlu0 %142
  %v144 = vsub.f32 %v135, %v143
  %v145 = vmul.f32 %v144, 1.442695
  %v146 = vpow.pop %v145
  %v147 = vsel %vm140, %v146, 0.0
  %148 = vadd.xlane.f32.xlu0 %v147
  %v149 = vpop.xlane.xlu0 %148
  %v150 = vrcp.pop %v149
  %v151 = vmul.f32 %v146, %v150
  %v152 = vld [vmem:[%s3] sm:$0xf]
  %v153 = vld [vmem:[%s3 + $0x4] sm:$0xf]
  %v154 = vld [vmem:[%s3 + $0x8] sm:$0xf]
  %v155 = vld [vmem:[%s3 + $0xc] sm:$0xf]
  %v156 = vld [vmem:[#allocation2] sm:$0x1]
  %v158 = vlaneseq
  %v159 = vshrl.u32 %v158, 7
  %v160 = vsub.s32 0, %v159
  %v161 = vrot.slane %v156, %v160
  %v167 = vunpack.c.l.b16 %v152
  %v168 = vunpack.c.l.b16 %v153
  %v169 = vunpack.c.l.b16 %v154
  %v170 = vunpack.c.l.b16 %v155
  %v171 = vpack.c.b16 %v168, %v167
  %v172 = vpack.c.b16 %v170, %v169
  %175 = vmatprep.subr.bf16.mxu0 0
  %176 = vmatpush1.bf16.msra.mxu0 %v171
  %177 = vmatprep.subr.bf16.mxu0 0
  %178 = vmatpush1.bf16.msra.mxu0 %v172
  %179 = vmatprep.subr.bf16.mxu0 0
  %180 = vmatpush1.bf16.msra.mxu0 0
  %181 = vmatprep.subr.bf16.mxu0 0
  %182 = vmatpush1.bf16.msra.mxu0 0
  %183 = vmatprep.subr.bf16.mxu0 0
  %184 = vmatpush1.bf16.msra.mxu0 0
  %185 = vmatprep.subr.bf16.mxu0 0
  %186 = vmatpush1.bf16.msra.mxu0 0
  %187 = vmatprep.subr.bf16.mxu0 0
  %188 = vmatpush1.bf16.msra.mxu0 0
  %189 = vmatprep.subr.bf16.mxu0 0
  %190 = vmatpush1.bf16.msra.mxu0 0
  %191 = vmatprep.subr.bf16.mxu0 0
  %192 = vmatpush1.bf16.msra.mxu0 0
  %193 = vmatprep.subr.bf16.mxu0 0
  %194 = vmatpush1.bf16.msra.mxu0 0
  %195 = vmatprep.subr.bf16.mxu0 0
  %196 = vmatpush1.bf16.msra.mxu0 0
  %197 = vmatprep.subr.bf16.mxu0 0
  %198 = vmatpush1.bf16.msra.mxu0 0
  %199 = vmatprep.subr.bf16.mxu0 0
  %200 = vmatpush1.bf16.msra.mxu0 0
  %201 = vmatprep.subr.bf16.mxu0 0
  %202 = vmatpush1.bf16.msra.mxu0 0
  %203 = vmatprep.subr.bf16.mxu0 0
  %204 = vmatpush1.bf16.msra.mxu0 0
  %205 = vmatprep.subr.bf16.mxu0 0
  %206 = vmatpush1.bf16.msra.mxu0 0
  %207 = vmatprep.mubr.bf16.mxu0 0
  %208 = vmatmul.mubr.bf16.gmra.mrb[0].mxu0 %v54
  %v209 = vpop.f32.mrb[0].mxu0
  %v210 = vadd.f32 %v161, %v209
  %v211 = vpop.f32.mrb[0].mxu0
  %v212 = vpop.f32.mrb[0].mxu0
  %v213 = vpop.f32.mrb[0].mxu0
  %214 = vdwg.mxu0
  %v215 = vld [vmem:[#allocation3] sm:$0x1]
  %v217 = vlaneseq
  %v218 = vshrl.u32 %v217, 7
  %v219 = vsub.s32 0, %v218
  %v220 = vrot.slane %v215, %v219
  %v223 = vsel %vm140, %v151, 0
  %225 = vmatprep.subr.mxu0 0.0
  %226 = vmatpush1.msra.mxu0 %v210
  %227 = vmatprep.subr.mxu0 0.0
  %228 = vmatpush1.msra.mxu0 0.0
  %229 = vmatprep.subr.mxu0 0.0
  %230 = vmatpush1.msra.mxu0 0.0
  %231 = vmatprep.subr.mxu0 0.0
  %232 = vmatpush1.msra.mxu0 0.0
  %233 = vmatprep.subr.mxu0 0.0
  %234 = vmatpush1.msra.mxu0 0.0
  %235 = vmatprep.subr.mxu0 0.0
  %236 = vmatpush1.msra.mxu0 0.0
  %237 = vmatprep.subr.mxu0 0.0
  %238 = vmatpush1.msra.mxu0 0.0
  %239 = vmatprep.subr.mxu0 0.0
  %240 = vmatpush1.msra.mxu0 0.0
  %241 = vmatprep.subr.mxu0 0.0
  %242 = vmatpush1.msra.mxu0 0.0
  %243 = vmatprep.subr.mxu0 0.0
  %244 = vmatpush1.msra.mxu0 0.0
  %245 = vmatprep.subr.mxu0 0.0
  %246 = vmatpush1.msra.mxu0 0.0
  %247 = vmatprep.subr.mxu0 0.0
  %248 = vmatpush1.msra.mxu0 0.0
  %249 = vmatprep.subr.mxu0 0.0
  %250 = vmatpush1.msra.mxu0 0.0
  %251 = vmatprep.subr.mxu0 0.0
  %252 = vmatpush1.msra.mxu0 0.0
  %253 = vmatprep.subr.mxu0 0.0
  %254 = vmatpush1.msra.mxu0 0.0
  %255 = vmatprep.subr.mxu0 0.0
  %256 = vmatpush1.msra.mxu0 0.0
  %257 = vmatprep.subr.mxu0 0.0
  %258 = vmatpush1.msra.mxu0 0.0
  %259 = vmatprep.subr.mxu0 0.0
  %260 = vmatpush1.msra.mxu0 0.0
  %261 = vmatprep.subr.mxu0 0.0
  %262 = vmatpush1.msra.mxu0 0.0
  %263 = vmatprep.subr.mxu0 0.0
  %264 = vmatpush1.msra.mxu0 0.0
  %265 = vmatprep.subr.mxu0 0.0
  %266 = vmatpush1.msra.mxu0 0.0
  %267 = vmatprep.subr.mxu0 0.0
  %268 = vmatpush1.msra.mxu0 0.0
  %269 = vmatprep.subr.mxu0 0.0
  %270 = vmatpush1.msra.mxu0 0.0
  %271 = vmatprep.subr.mxu0 0.0
  %272 = vmatpush1.msra.mxu0 0.0
  %273 = vmatprep.subr.mxu0 0.0
  %274 = vmatpush1.msra.mxu0 0.0
  %275 = vmatprep.subr.mxu0 0.0
  %276 = vmatpush1.msra.mxu0 0.0
  %277 = vmatprep.subr.mxu0 0.0
  %278 = vmatpush1.msra.mxu0 0.0
  %279 = vmatprep.subr.mxu0 0.0
  %280 = vmatpush1.msra.mxu0 0.0
  %281 = vmatprep.subr.mxu0 0.0
  %282 = vmatpush1.msra.mxu0 0.0
  %283 = vmatprep.subr.mxu0 0.0
  %284 = vmatpush1.msra.mxu0 0.0
  %285 = vmatprep.subr.mxu0 0.0
  %286 = vmatpush1.msra.mxu0 0.0
  %287 = vmatprep.subr.mxu0 0.0
  %288 = vmatpush1.msra.mxu0 0.0
  %289 = vmatprep.mubr.f32.mxu0 0.0
  %290 = vmatmul.mubr.f32.gmra.mrb[0].mxu0 %v223
  %v291 = vpop.f32.mrb[0].mxu0
  %v292 = vadd.f32 %v220, %v291
  %v293 = vpop.f32.mrb[0].mxu0
  %294 = vdwg.mxu0
  %v295 = vxor.u32 %v292, 2147483648
  %v296 = vmul.f32 %v295, 1.442695
  %v297 = vpow.pop %v296
  %v298 = vadd.f32 %v297, 1.0
  %v299 = vrcp.pop %v298
  %v300 = vmul.f32 1.0, %v299
  %vm301 = vcmask 7168
  %302 = vst.msk [vmem:[%s6] sm:$0xff] %vm301, %v300
  // Predicated region
  $region26: #{tpu_custom_call.1} parent=0 // pred_check
    _
  $region27: #{tpu_custom_call.1} parent=0 // pred_check_branch
    %304 = sbr.rel (0) target = $region29
  $region28: #{tpu_custom_call.1} parent=0 // pred_region
    _
  $region29: #{tpu_custom_call.1} parent=0 // pred_fallthru
    _
  // Predicated region
  $region30: #{tpu_custom_call.1} parent=0 // pred_check
    _
  $region31: #{tpu_custom_call.1} parent=0 // pred_check_branch
    %306 = sbr.rel (0) target = $region33
  $region32: #{tpu_custom_call.1} parent=0 // pred_region
    _
  $region33: #{tpu_custom_call.1} parent=0 // pred_fallthru
    _

</llo_original>
